<compile_context>
chip_gen: v6e
topology: v6e:2x2x1
jax: 0.10.0
libtpu: 0.0.40
codegen_flags: <defaults>
</compile_context>

<pallas_src>
import functools

import jax
import jax.numpy as jnp
from jax import lax
from jax.experimental import pallas as pl
from jax.experimental.pallas import tpu as pltpu


def _round_up(x, m):
    return ((x + m - 1) // m) * m


def _focal_loss_kernel(*refs, gamma, n_rows, tile_n, has_alpha):
    if has_alpha:
        logits_ref, targets_ref, alpha_ref, out_ref = refs
    else:
        logits_ref, targets_ref, out_ref = refs
        alpha_ref = None

    i = pl.program_id(0)

    logits = logits_ref[...].astype(jnp.float32)        # (tile_n, C)
    tgt = targets_ref[...]                               # (tile_n, 1) int32
    tn, c = logits.shape

    # In-kernel "one-hot": class-id iota along lanes compared to the target id.
    class_ids = lax.broadcasted_iota(jnp.int32, (tn, c), 1)
    mask = class_ids == tgt                               # (tile_n, C) bool

    # Numerically-stable softmax pieces; one exp per logit, one log per row.
    m = jnp.max(logits, axis=-1, keepdims=True)           # (tile_n, 1)
    e = jnp.exp(logits - m)                                # (tile_n, C)
    denom = jnp.sum(e, axis=-1, keepdims=True)             # sum_j exp(z_j - m)
    target_e = jnp.sum(jnp.where(mask, e, 0.0), axis=-1, keepdims=True)
    target_logit = jnp.sum(jnp.where(mask, logits, 0.0), axis=-1, keepdims=True)

    # ce = lse - z_t ;  pt = exp(-ce) = exp(z_t - m) / denom  (no second exp).
    ce = (m - target_logit) + jnp.log(denom)               # (tile_n, 1)
    pt = target_e / denom

    # Focal modulation; clamp base at 0 (fp rounding can push pt above 1).
    base = jnp.maximum(1.0 - pt, 0.0)
    if float(gamma) == int(gamma) and gamma >= 0:
        modulator = lax.integer_pow(base, int(gamma))      # VPU muls, no log/exp
    else:
        modulator = base ** jnp.float32(gamma)
    focal = modulator * ce

    if has_alpha:
        # alpha_t = alpha[targets] via masked lane reduce (alpha row is tiny).
        alpha_row = alpha_ref[...].astype(jnp.float32)      # (1, C)
        alpha_t = jnp.sum(jnp.where(mask, alpha_row, 0.0), axis=-1, keepdims=True)
        focal = alpha_t * focal

    # Mask out garbage rows of a partial last block (no wrapper-side padding).
    row_ids = i * tile_n + lax.broadcasted_iota(jnp.int32, (tn, 1), 0)
    focal = jnp.where(row_ids < n_rows, focal, 0.0)

    # Per-tile partial sum -> SMEM scalar output block for this grid step.
    out_ref[0, 0] = jnp.sum(focal)


def focal_loss(inputs, targets, gamma=2.0, alpha=None, target_tile_bytes=4 << 20):
    """inputs: (N, C) float logits (any float dtype); targets: (N,) int class ids."""
    n, c = inputs.shape
    itemsize = jnp.dtype(inputs.dtype).itemsize

    # Dtype-aware sublane multiple: 8 (f32), 16 (bf16), 32 (int8/fp8).
    sub = max(8, 32 // itemsize)

    # Size the tile by bytes (~target_tile_bytes of logits per buffer), rounded
    # to the sublane multiple and capped at the (rounded-up) batch size.
    rows = max(1, int(target_tile_bytes) // max(1, c * itemsize))
    tile_n = int(min(_round_up(n, sub), max(sub, _round_up(rows, sub))))
    num_tiles = pl.cdiv(n, tile_n)

    targets2d = targets.astype(jnp.int32).reshape(n, 1)

    has_alpha = alpha is not None

    in_specs = [
        pl.BlockSpec((tile_n, c), lambda i: (i, 0)),        # logits (native dtype)
        pl.BlockSpec((tile_n, 1), lambda i: (i, 0)),        # int32 targets
    ]
    args = [inputs, targets2d]
    if has_alpha:
        alpha_row = jnp.asarray(alpha, dtype=jnp.float32).reshape(1, c)
        in_specs.append(pl.BlockSpec((1, c), lambda i: (0, 0)))  # alpha row (tiny)
        args.append(alpha_row)

    # Explicit scoped-VMEM budget derived from the actual double-buffered
    # footprint (safe on v5e 16 MiB default and within v7x's 64 MiB physical).
    logits_tile_bytes = tile_n * c * itemsize
    vmem_needed = 2 * (logits_tile_bytes + tile_n * 4 + c * 4) + (4 << 20)
    vmem_limit = int(min(max(vmem_needed, 16 << 20), 48 << 20))

    kernel = functools.partial(
        _focal_loss_kernel, gamma=float(gamma), n_rows=n, tile_n=tile_n,
        has_alpha=has_alpha)

    partials = pl.pallas_call(
        kernel,
        out_shape=jax.ShapeDtypeStruct((num_tiles, 1), jnp.float32),
        grid=(num_tiles,),
        in_specs=in_specs,
        out_specs=pl.BlockSpec((1, 1), lambda i: (i, 0),
                               memory_space=pltpu.MemorySpace.SMEM),
        compiler_params=pltpu.CompilerParams(
            dimension_semantics=("parallel",),
            vmem_limit_bytes=vmem_limit),
    )(*args)

    # Final reduction over per-tile partials; divide by the TRUE batch size.
    return jnp.sum(partials) / jnp.float32(n)


def _focal_loss_ref(inputs, targets, gamma=2.0, alpha=None):
    """Pure-JAX reference mirroring the PyTorch module."""
    logp = jax.nn.log_softmax(inputs.astype(jnp.float32), axis=-1)
    ce = -jnp.take_along_axis(logp, targets[:, None], axis=-1)[:, 0]
    pt = jnp.exp(-ce)
    focal = (1.0 - pt) ** gamma * ce
    if alpha is not None:
        focal = jnp.asarray(alpha, jnp.float32)[targets] * focal
    return jnp.mean(focal)


if __name__ == "__main__":
    key = jax.random.PRNGKey(0)
    k1, k2 = jax.random.split(key)

    N, C = 8, 16  # batch=8 samples, 16 classes
    inputs = jax.random.normal(k1, (N, C), dtype=jnp.float32)
    targets = jax.random.randint(k2, (N,), 0, C, dtype=jnp.int32)
    # Deterministic per-class alpha weights (exercises the alpha branch).
    alpha = jnp.linspace(0.25, 1.0, C, dtype=jnp.float32)

    loss = focal_loss(inputs, targets, gamma=2.0, alpha=alpha)
    loss = jax.block_until_ready(loss)

    ref = _focal_loss_ref(inputs, targets, gamma=2.0, alpha=alpha)
    assert jnp.allclose(loss, ref, rtol=1e-5, atol=1e-5), (loss, ref)

    # No-alpha path, multiple tiles, and a partial (unpadded) last block:
    # tiny target_tile_bytes -> tile_n=16, grid=3 for N=37.
    N2, C2 = 37, 16
    k3, k4 = jax.random.split(k1)
    inputs2 = jax.random.normal(k3, (N2, C2), dtype=jnp.float32)
    targets2 = jax.random.randint(k4, (N2,), 0, C2, dtype=jnp.int32)
    loss2 = jax.block_until_ready(
        focal_loss(inputs2, targets2, gamma=2.0, target_tile_bytes=1024))
    ref2 = _focal_loss_ref(inputs2, targets2, gamma=2.0)
    assert jnp.allclose(loss2, ref2, rtol=1e-5, atol=1e-5), (loss2, ref2)

    print("KERNEL_OK")
</pallas_src>

<mosaic_0001>
module attributes {stable_mosaic.version = 11 : i64} {
  func.func @_focal_loss_kernel(%arg0: i32, %arg1: memref<8x16xf32, #tpu.memory_space<vmem>>, %arg2: memref<8x1xi32, #tpu.memory_space<vmem>>, %arg3: memref<1x16xf32, #tpu.memory_space<vmem>>, %arg4: memref<1x1xf32, #tpu.memory_space<smem>>) attributes {dimension_semantics = [#tpu.dimension_semantics<parallel>], iteration_bounds = array<i64: 1>, scalar_prefetch = 0 : i64, scratch_operands = 0 : i64, tpu.core_type = #tpu.core_type<tc>, window_params = [{transform_indices = @transform_0, window_bounds = array<i64: 8, 16>}, {transform_indices = @transform_1, window_bounds = array<i64: 8, 1>}, {pipeline_mode = #tpu.pipeline_mode<synchronous>, transform_indices = @transform_2, window_bounds = array<i64: 1, 16>}, {transform_indices = @transform_3, window_bounds = array<i64: 1, 1>}]} {
    %c0 = arith.constant 0 : index
    %c0_0 = arith.constant 0 : index
    %0 = vector.load %arg1[%c0, %c0_0] : memref<8x16xf32, #tpu.memory_space<vmem>>, vector<8x16xf32>
    %c0_1 = arith.constant 0 : index
    %c0_2 = arith.constant 0 : index
    %1 = vector.load %arg2[%c0_1, %c0_2] : memref<8x1xi32, #tpu.memory_space<vmem>>, vector<8x1xi32>
    %2 = tpu.iota {dimensions = array<i32: 1>} : vector<8x16xi32>
    %3 = vector.broadcast %1 : vector<8x1xi32> to vector<8x16xi32>
    %4 = arith.cmpi eq, %2, %3 : vector<8x16xi32>
    %cst = arith.constant dense<0xFF800000> : vector<8xf32>
    %5 = vector.multi_reduction <maximumf>, %0, %cst [1] : vector<8x16xf32> to vector<8xf32>
    %6 = vector.shape_cast %5 : vector<8xf32> to vector<8x1xf32>
    %7 = vector.broadcast %6 : vector<8x1xf32> to vector<8x16xf32>
    %8 = arith.subf %0, %7 : vector<8x16xf32>
    %9 = math.exp %8 : vector<8x16xf32>
    %cst_3 = arith.constant dense<0.000000e+00> : vector<8xf32>
    %10 = vector.multi_reduction <add>, %9, %cst_3 [1] : vector<8x16xf32> to vector<8xf32>
    %11 = vector.shape_cast %10 : vector<8xf32> to vector<8x1xf32>
    %cst_4 = arith.constant 0.000000e+00 : f32
    %12 = vector.broadcast %cst_4 : f32 to vector<8x16xf32>
    %13 = arith.select %4, %9, %12 : vector<8x16xi1>, vector<8x16xf32>
    %cst_5 = arith.constant dense<0.000000e+00> : vector<8xf32>
    %14 = vector.multi_reduction <add>, %13, %cst_5 [1] : vector<8x16xf32> to vector<8xf32>
    %15 = vector.shape_cast %14 : vector<8xf32> to vector<8x1xf32>
    %cst_6 = arith.constant 0.000000e+00 : f32
    %16 = vector.broadcast %cst_6 : f32 to vector<8x16xf32>
    %17 = arith.select %4, %0, %16 : vector<8x16xi1>, vector<8x16xf32>
    %cst_7 = arith.constant dense<0.000000e+00> : vector<8xf32>
    %18 = vector.multi_reduction <add>, %17, %cst_7 [1] : vector<8x16xf32> to vector<8xf32>
    %19 = vector.shape_cast %18 : vector<8xf32> to vector<8x1xf32>
    %20 = arith.subf %6, %19 : vector<8x1xf32>
    %21 = math.log %11 : vector<8x1xf32>
    %22 = arith.addf %20, %21 : vector<8x1xf32>
    %23 = arith.divf %15, %11 : vector<8x1xf32>
    %cst_8 = arith.constant 1.000000e+00 : f32
    %24 = vector.broadcast %cst_8 : f32 to vector<8x1xf32>
    %25 = arith.subf %24, %23 : vector<8x1xf32>
    %cst_9 = arith.constant 0.000000e+00 : f32
    %26 = vector.broadcast %cst_9 : f32 to vector<8x1xf32>
    %27 = arith.maximumf %25, %26 : vector<8x1xf32>
    %28 = arith.mulf %27, %27 : vector<8x1xf32>
    %29 = arith.mulf %28, %22 : vector<8x1xf32>
    %c0_10 = arith.constant 0 : index
    %c0_11 = arith.constant 0 : index
    %30 = vector.load %arg3[%c0_10, %c0_11] : memref<1x16xf32, #tpu.memory_space<vmem>>, vector<1x16xf32>
    %cst_12 = arith.constant 0.000000e+00 : f32
    %31 = vector.shape_cast %30 : vector<1x16xf32> to vector<1x16xf32>
    %32 = vector.broadcast %31 : vector<1x16xf32> to vector<8x16xf32>
    %33 = vector.broadcast %cst_12 : f32 to vector<8x16xf32>
    %34 = arith.select %4, %32, %33 : vector<8x16xi1>, vector<8x16xf32>
    %cst_13 = arith.constant dense<0.000000e+00> : vector<8xf32>
    %35 = vector.multi_reduction <add>, %34, %cst_13 [1] : vector<8x16xf32> to vector<8xf32>
    %36 = vector.shape_cast %35 : vector<8xf32> to vector<8x1xf32>
    %37 = arith.mulf %36, %29 : vector<8x1xf32>
    %c8_i32 = arith.constant 8 : i32
    %38 = arith.muli %arg0, %c8_i32 : i32
    %39 = tpu.iota {dimensions = array<i32: 0>} : vector<8x1xi32>
    %40 = vector.broadcast %38 : i32 to vector<8x1xi32>
    %41 = arith.addi %40, %39 : vector<8x1xi32>
    %c8_i32_14 = arith.constant 8 : i32
    %42 = vector.broadcast %c8_i32_14 : i32 to vector<8x1xi32>
    %43 = arith.cmpi slt, %41, %42 : vector<8x1xi32>
    %cst_15 = arith.constant 0.000000e+00 : f32
    %44 = vector.broadcast %cst_15 : f32 to vector<8x1xf32>
    %45 = arith.select %43, %37, %44 : vector<8x1xi1>, vector<8x1xf32>
    %46 = vector.shape_cast %45 : vector<8x1xf32> to vector<1x8x1xf32>
    %cst_16 = arith.constant dense<0.000000e+00> : vector<1xf32>
    %47 = vector.multi_reduction <add>, %46, %cst_16 [1, 2] : vector<1x8x1xf32> to vector<1xf32>
    %48 = vector.shape_cast %47 : vector<1xf32> to vector<1x1x1xf32>
    %49 = vector.extract %48[0, 0, 0] : f32 from vector<1x1x1xf32>
    %c0_17 = arith.constant 0 : index
    %c0_18 = arith.constant 0 : index
    %50 = memref.load %arg4[%c0_17, %c0_18] : memref<1x1xf32, #tpu.memory_space<smem>>
    memref.store %49, %arg4[%c0_17, %c0_18] : memref<1x1xf32, #tpu.memory_space<smem>>
    return
  }
  func.func @transform_0(%arg0: i32) -> (i32, i32) {
    %c0_i32 = arith.constant 0 : i32
    %c0_i32_0 = arith.constant 0 : i32
    return %arg0, %c0_i32 : i32, i32
  }
  func.func @transform_1(%arg0: i32) -> (i32, i32) {
    %c0_i32 = arith.constant 0 : i32
    %c0_i32_0 = arith.constant 0 : i32
    return %arg0, %c0_i32 : i32, i32
  }
  func.func @transform_2(%arg0: i32) -> (i32, i32) {
    %c0_i32 = arith.constant 0 : i32
    %c0_i32_0 = arith.constant 0 : i32
    %c0_i32_1 = arith.constant 0 : i32
    return %c0_i32, %c0_i32_0 : i32, i32
  }
  func.func @transform_3(%arg0: i32) -> (i32, i32) {
    %c0_i32 = arith.constant 0 : i32
    %c0_i32_0 = arith.constant 0 : i32
    return %arg0, %c0_i32 : i32, i32
  }
}

</mosaic_0001>

<llo_original>
// kernel: tpu_custom_call.1
$region0: #{tpu_custom_call.1}
  #allocation0 [shape = 'u32[]', space=smem, size = 0x4, offset = 0x4, fixed_abs, tag = 'smem constant byte address 0x4 - core index']
  #allocation1 [shape = 'u32[144,128]{1,0:T(1,128)}', space=vmem, size = 0x12000, scoped, tag = 'internal scratch']
  %s0 = inlined_call_operand.vmem [shape: f32[8,16], index: 0, kind: input, shape index: {}]
  %s1 = inlined_call_operand.vmem [shape: s32[8,1], index: 1, kind: input, shape index: {}]
  %s2 = inlined_call_operand.vmem [shape: f32[1,16], index: 2, kind: input, shape index: {}]
  %s3 = inlined_call_operand.hbm [shape: f32[1,1], index: 3, kind: output, shape index: {}]
  %s4 = sld [smem:[#allocation0]]
  $region22: #{tpu_custom_call.1} parent=0
    _
  %s6 = ssub.s32 1, %s4
  %s7 = scalar_select 0, %s6, %s4
  $region1: #{tpu_custom_call.1} parent=0
    #allocation2 [shape = 'u8[512]{0}', space=smem, size = 0x200, scoped, tag = 'output window, operand 0, single buffered']
    #allocation3 [shape = 's32[1]{0}', space=sflag, size = 0x4, scoped, tag = 'scoped memory for tpu_custom_call.1']
    %8 = vsyncpa [#allocation3], 0
    // Predicated region
    $region2: #{tpu_custom_call.1} parent=1 // pred_check
      _
    $region3: #{tpu_custom_call.1} parent=1 // pred_check_branch
      %10 = sbr.rel (0) target = $region5
    $region4: #{tpu_custom_call.1} parent=1 // pred_region
      _
    $region5: #{tpu_custom_call.1} parent=1 // pred_fallthru
      _
    // Predicated region
    $region6: #{tpu_custom_call.1} parent=1 // pred_check
      _
    $region7: #{tpu_custom_call.1} parent=1 // pred_check_branch
      %12 = sbr.rel (0) target = $region9
    $region8: #{tpu_custom_call.1} parent=1 // pred_region
      _
    $region9: #{tpu_custom_call.1} parent=1 // pred_fallthru
      _
    // Predicated region
    $region10: #{tpu_custom_call.1} parent=1 // pred_check
      _
    $region11: #{tpu_custom_call.1} parent=1 // pred_check_branch
      %14 = sbr.rel (0) target = $region13
    $region12: #{tpu_custom_call.1} parent=1 // pred_region
      _
    $region13: #{tpu_custom_call.1} parent=1 // pred_fallthru
      _
    %v15 = vld [vmem:[%s0] sm:$0xff]
    %v16 = vld [vmem:[%s1] sm:$0xff]
    %v17 = vlaneseq
    %v18 = vand.u32 %v17, 127
    %19 = vset.pattern.permute.xlu0 0
    %20 = vperm.xlu0 %19, %v16
    %v21 = vpop.permute.xlu0 %20
    %vm22 = vcmp.eq.s32.totalorder %v18, %v21
    %vm23 = vcmask 130048
    %v24 = vsel %vm23, %v15, -inf
    %25 = vmax.xlane.f32.xlu0 %v24
    %v26 = vpop.xlane.xlu0 %25
    %v27 = vsub.f32 %v15, %v26
    %v28 = vmul.f32 %v27, 1.442695
    %v29 = vpow.pop %v28
    %v30 = vsel %vm23, %v29, 0.0
    %31 = vadd.xlane.f32.xlu0 %v30
    %v32 = vpop.xlane.xlu0 %31
    %v33 = vsel %vm22, %v29, 0.0
    %v34 = vsel %vm23, %v33, 0.0
    %35 = vadd.xlane.f32.xlu0 %v34
    %v36 = vpop.xlane.xlu0 %35
    %v37 = vsel %vm22, %v15, 0.0
    %v38 = vsel %vm23, %v37, 0.0
    %39 = vadd.xlane.f32.xlu0 %v38
    %v40 = vpop.xlane.xlu0 %39
    %v41 = vsub.f32 %v26, %v40
    %v42 = vlog2.pop %v32
    %v43 = vmul.f32 %v42, 0.6931472
    %v44 = vadd.f32 %v41, %v43
    %v45 = vrcp.pop %v32
    %v46 = vmul.f32 %v36, %v45
    %v47 = vsub.f32 1.0, %v46
    %v48 = vmax.f32 %v47, 0.0
    %v49 = vmul.f32 %v48, %v48
    %v50 = vmul.f32 %v49, %v44
    %v51 = vld [vmem:[%s2] sm:$0x1]
    %v53 = vlaneseq
    %v54 = vshrl.u32 %v53, 7
    %v55 = vsub.s32 0, %v54
    %v56 = vrot.slane %v51, %v55
    %v58 = vsel %vm22, %v56, 0.0
    %v59 = vsel %vm23, %v58, 0.0
    %60 = vadd.xlane.f32.xlu0 %v59
    %v61 = vpop.xlane.xlu0 %60
    %v62 = vmul.f32 %v61, %v50
    %s63 = smul.u32 0, 8
    %v64 = vlaneseq
    %v65 = vshrl.u32 %v64, 7
    %v66 = vstv %s63
    %v67 = vadd.s32 %v66, %v65
    %vm68 = vcmp.lt.s32.totalorder %v67, 8
    %v69 = vsel %vm68, %v62, 0.0
    %vm70 = vcmask 7168
    %v71 = vsel %vm70, %v69, 0.0
    %72 = vadd.xlane.f32.xlu0 %v71
    %v73 = vpop.xlane.xlu0 %72
    %v74 = vrot.slane %v73, 4
    %v75 = vadd.f32 %v73, %v74
    %v76 = vrot.slane %v75, 2
    %v77 = vadd.f32 %v75, %v76
    %v78 = vrot.slane %v77, 1
    %v79 = vadd.f32 %v77, %v78
    %s80 = vtos %v79
    %s81 = scalar_lea.smem [#allocation2], 0
    %82 = sst [smem:[%s81]] %s80
    // Predicated region
    $region14: #{tpu_custom_call.1} parent=1 // pred_check
      _
    $region15: #{tpu_custom_call.1} parent=1 // pred_check_branch
      %84 = sbr.rel (0) target = $region17
    $region16: #{tpu_custom_call.1} parent=1 // pred_region
      %s86 = ssub.s32 16, 16
      %87 = vsyncadd [#allocation3], %s86
      %90 = dma.smem_to_hbm [#allocation2], 16, %s3, [#allocation3]
    $region17: #{tpu_custom_call.1} parent=1 // pred_fallthru
      _
    // Predicated region
    $region18: #{tpu_custom_call.1} parent=1 // pred_check
      _
    $region19: #{tpu_custom_call.1} parent=1 // pred_check_branch
      %92 = sbr.rel (0) target = $region21
    $region20: #{tpu_custom_call.1} parent=1 // pred_region
      %93 = dma.done [#allocation3], 16
    $region21: #{tpu_custom_call.1} parent=1 // pred_fallthru
      _
    %94 = sfence
    %95 = vsyncpa [#allocation3], 1

</llo_original>
